<compile_context>
chip_gen: v5e
topology: v5e:2x2
jax: 0.10.0
libtpu: 0.0.40
codegen_flags: <defaults>
</compile_context>

<pallas_src>
import functools

import jax
import jax.numpy as jnp
from jax.experimental import pallas as pl
from jax.experimental.pallas import tpu as pltpu


def _ce_kernel(x_ref, t_ref, w_ref, lacc_ref, wacc_ref, *, ignore_label):
    n = pl.program_id(0)
    m = pl.program_id(1)

    @pl.when((n == 0) & (m == 0))
    def _init():
        lacc_ref[...] = jnp.zeros_like(lacc_ref)
        wacc_ref[...] = jnp.zeros_like(wacc_ref)

    x = x_ref[0].astype(jnp.float32)    # (C, TILE_M) logits
    t = t_ref[0]                        # (1, TILE_M) int32 labels
    w = w_ref[...]                      # (C, 1) class weights

    C, TM = x.shape

    # numerically-stable log-sum-exp over the class (sublane) axis
    x_max = jnp.max(x, axis=0, keepdims=True)                         # (1, TM)
    lse = jnp.log(jnp.sum(jnp.exp(x - x_max), axis=0, keepdims=True)) + x_max

    # gather the target-class logit and class weight via a one-hot compare
    ch = jax.lax.broadcasted_iota(jnp.int32, (C, TM), 0)
    onehot = (ch == t).astype(jnp.float32)                            # (C, TM)
    x_t = jnp.sum(x * onehot, axis=0, keepdims=True)                  # (1, TM)
    w_t = jnp.sum(w * onehot, axis=0, keepdims=True)                  # (1, TM)

    # ignore_label pixels (and spatial padding) contribute nothing to either sum
    w_t = jnp.where(t != ignore_label, w_t, 0.0)

    lacc_ref[...] += (lse - x_t) * w_t     # weighted NLL partial sums (per lane)
    wacc_ref[...] += w_t                   # normalizer partial sums (per lane)


def cross_entropy_loss(score, target, weight=None, ignore_label=255,
                       tile_m=1024):
    """score: (N, C, H, W) float; target: (N, H, W) int; weight: (C,) or None."""
    N, C, H, W = score.shape
    HW = H * W

    # lane tile: multiple of 128; pad the flattened spatial axis up to a tile
    # multiple (padded pixels are labelled ignore_label -> contribute zero).
    tile_m = min(tile_m, pl.cdiv(HW, 128) * 128)
    hw_pad = pl.cdiv(HW, tile_m) * tile_m

    x = score.reshape(N, C, HW)                       # free reshape, no transpose
    t = target.astype(jnp.int32).reshape(N, 1, HW)
    if hw_pad != HW:
        # TODO(synk): a masked remainder tile would avoid this pad copy.
        x = jnp.pad(x, ((0, 0), (0, 0), (0, hw_pad - HW)))
        t = jnp.pad(t, ((0, 0), (0, 0), (0, hw_pad - HW)),
                    constant_values=ignore_label)

    if weight is None:
        w = jnp.ones((C, 1), jnp.float32)
    else:
        w = weight.astype(jnp.float32).reshape(C, 1)

    grid = (N, hw_pad // tile_m)
    l_part, w_part = pl.pallas_call(
        functools.partial(_ce_kernel, ignore_label=ignore_label),
        out_shape=(
            jax.ShapeDtypeStruct((1, tile_m), jnp.float32),
            jax.ShapeDtypeStruct((1, tile_m), jnp.float32),
        ),
        grid_spec=pltpu.PrefetchScalarGridSpec(
            num_scalar_prefetch=0,
            grid=grid,
            in_specs=[
                pl.BlockSpec((1, C, tile_m), lambda n, m: (n, 0, m)),  # logits
                pl.BlockSpec((1, 1, tile_m), lambda n, m: (n, 0, m)),  # labels
                pl.BlockSpec((C, 1), lambda n, m: (0, 0)),             # weights
            ],
            out_specs=(
                pl.BlockSpec((1, tile_m), lambda n, m: (0, 0)),  # resident accum
                pl.BlockSpec((1, tile_m), lambda n, m: (0, 0)),  # resident accum
            ),
        ),
        compiler_params=pltpu.CompilerParams(
            dimension_semantics=("arbitrary", "arbitrary"),
            vmem_limit_bytes=32 * 1024 * 1024,
        ),
    )(x, t, w)

    return jnp.sum(l_part) / jnp.sum(w_part)


def cross_entropy_ref(score, target, weight=None, ignore_label=255):
    """Pure-JAX reference mirroring nn.CrossEntropyLoss(weight, ignore_index)."""
    N, C, H, W = score.shape
    logp = jax.nn.log_softmax(score.astype(jnp.float32), axis=1)
    t = target.astype(jnp.int32)
    valid = (t != ignore_label)
    t_safe = jnp.where(valid, t, 0)
    nll = -jnp.take_along_axis(logp, t_safe[:, None], axis=1)[:, 0]
    w = jnp.ones((C,), jnp.float32) if weight is None else weight.astype(jnp.float32)
    wt = w[t_safe] * valid.astype(jnp.float32)
    return jnp.sum(nll * wt) / jnp.sum(wt)


if __name__ == "__main__":
    key = jax.random.PRNGKey(0)
    k1, k2, k3 = jax.random.split(key, 3)

    N, C, H, W = 2, 19, 16, 16
    IGNORE = 255
    score = jax.random.normal(k1, (N, C, H, W), dtype=jnp.float32)
    target = jax.random.randint(k2, (N, H, W), 0, C).astype(jnp.int32)
    # sprinkle some ignored pixels to exercise ignore_index masking
    target = jnp.where(jax.random.uniform(k3, (N, H, W)) < 0.2, IGNORE, target)

    # weight=None (module default)
    loss = jax.block_until_ready(
        cross_entropy_loss(score, target, weight=None, ignore_label=IGNORE))
    ref = cross_entropy_ref(score, target, weight=None, ignore_label=IGNORE)
    assert jnp.allclose(loss, ref, rtol=1e-5, atol=1e-5), (loss, ref)

    # explicit per-class weights
    cls_w = jnp.linspace(0.5, 2.0, C).astype(jnp.float32)
    loss_w = jax.block_until_ready(
        cross_entropy_loss(score, target, weight=cls_w, ignore_label=IGNORE))
    ref_w = cross_entropy_ref(score, target, weight=cls_w, ignore_label=IGNORE)
    assert jnp.allclose(loss_w, ref_w, rtol=1e-5, atol=1e-5), (loss_w, ref_w)

    print("KERNEL_OK")
</pallas_src>

<mosaic_0001>
module attributes {stable_mosaic.version = 11 : i64} {
  func.func @_ce_kernel(%arg0: i32, %arg1: i32, %arg2: memref<1x19x256xf32, #tpu.memory_space<vmem>>, %arg3: memref<1x1x256xi32, #tpu.memory_space<vmem>>, %arg4: memref<19x1xf32, #tpu.memory_space<vmem>>, %arg5: memref<1x256xf32, #tpu.memory_space<vmem>>, %arg6: memref<1x256xf32, #tpu.memory_space<vmem>>) attributes {dimension_semantics = [#tpu.dimension_semantics<arbitrary>, #tpu.dimension_semantics<arbitrary>], iteration_bounds = array<i64: 2, 1>, scalar_prefetch = 0 : i64, scratch_operands = 0 : i64, tpu.core_type = #tpu.core_type<tc>, window_params = [{transform_indices = @transform_0, window_bounds = array<i64: 1, 19, 256>}, {transform_indices = @transform_1, window_bounds = array<i64: 1, 1, 256>}, {pipeline_mode = #tpu.pipeline_mode<synchronous>, transform_indices = @transform_2, window_bounds = array<i64: 19, 1>}, {pipeline_mode = #tpu.pipeline_mode<synchronous>, transform_indices = @transform_3, window_bounds = array<i64: 1, 256>}, {pipeline_mode = #tpu.pipeline_mode<synchronous>, transform_indices = @transform_4, window_bounds = array<i64: 1, 256>}]} {
    %c0_i32 = arith.constant 0 : i32
    %0 = arith.cmpi eq, %arg0, %c0_i32 : i32
    %c0_i32_0 = arith.constant 0 : i32
    %1 = arith.cmpi eq, %arg1, %c0_i32_0 : i32
    %2 = arith.andi %0, %1 : i1
    %3 = arith.extui %2 : i1 to i32
    %c0_i32_1 = arith.constant 0 : i32
    %4 = arith.cmpi ne, %3, %c0_i32_1 : i32
    scf.if %4 {
      %cst_21 = arith.constant 0.000000e+00 : f32
      %43 = vector.broadcast %cst_21 : f32 to vector<1x256xf32>
      %c0_22 = arith.constant 0 : index
      %c0_23 = arith.constant 0 : index
      %44 = vector.load %arg5[%c0_22, %c0_23] : memref<1x256xf32, #tpu.memory_space<vmem>>, vector<1x256xf32>
      tpu.vector_store %arg5[%c0_22, %c0_23], %43 {strides = array<i32>} : memref<1x256xf32, #tpu.memory_space<vmem>>, vector<1x256xf32>,
      %cst_24 = arith.constant 0.000000e+00 : f32
      %45 = vector.broadcast %cst_24 : f32 to vector<1x256xf32>
      %c0_25 = arith.constant 0 : index
      %c0_26 = arith.constant 0 : index
      %46 = vector.load %arg6[%c0_25, %c0_26] : memref<1x256xf32, #tpu.memory_space<vmem>>, vector<1x256xf32>
      tpu.vector_store %arg6[%c0_25, %c0_26], %45 {strides = array<i32>} : memref<1x256xf32, #tpu.memory_space<vmem>>, vector<1x256xf32>,
    } else {
    }
    %c0 = arith.constant 0 : index
    %c0_2 = arith.constant 0 : index
    %c0_3 = arith.constant 0 : index
    %5 = vector.load %arg2[%c0, %c0_2, %c0_3] : memref<1x19x256xf32, #tpu.memory_space<vmem>>, vector<1x19x256xf32>
    %6 = vector.shape_cast %5 : vector<1x19x256xf32> to vector<19x256xf32>
    %c0_4 = arith.constant 0 : index
    %c0_5 = arith.constant 0 : index
    %c0_6 = arith.constant 0 : index
    %7 = vector.load %arg3[%c0_4, %c0_5, %c0_6] : memref<1x1x256xi32, #tpu.memory_space<vmem>>, vector<1x1x256xi32>
    %8 = vector.shape_cast %7 : vector<1x1x256xi32> to vector<1x256xi32>
    %c0_7 = arith.constant 0 : index
    %c0_8 = arith.constant 0 : index
    %9 = vector.load %arg4[%c0_7, %c0_8] : memref<19x1xf32, #tpu.memory_space<vmem>>, vector<19x1xf32>
    %cst = arith.constant dense<0xFF800000> : vector<256xf32>
    %10 = vector.multi_reduction <maximumf>, %6, %cst [0] : vector<19x256xf32> to vector<256xf32>
    %11 = vector.shape_cast %10 : vector<256xf32> to vector<1x256xf32>
    %12 = vector.broadcast %11 : vector<1x256xf32> to vector<19x256xf32>
    %13 = arith.subf %6, %12 : vector<19x256xf32>
    %14 = math.exp %13 : vector<19x256xf32>
    %cst_9 = arith.constant dense<0.000000e+00> : vector<256xf32>
    %15 = vector.multi_reduction <add>, %14, %cst_9 [0] : vector<19x256xf32> to vector<256xf32>
    %16 = vector.shape_cast %15 : vector<256xf32> to vector<1x256xf32>
    %17 = math.log %16 : vector<1x256xf32>
    %18 = arith.addf %17, %11 : vector<1x256xf32>
    %19 = tpu.iota {dimensions = array<i32: 0>} : vector<19x256xi32>
    %20 = vector.broadcast %8 : vector<1x256xi32> to vector<19x256xi32>
    %21 = arith.cmpi eq, %19, %20 : vector<19x256xi32>
    %22 = arith.extui %21 : vector<19x256xi1> to vector<19x256xi32>
    %23 = arith.sitofp %22 : vector<19x256xi32> to vector<19x256xf32>
    %24 = arith.mulf %6, %23 : vector<19x256xf32>
    %cst_10 = arith.constant dense<0.000000e+00> : vector<256xf32>
    %25 = vector.multi_reduction <add>, %24, %cst_10 [0] : vector<19x256xf32> to vector<256xf32>
    %26 = vector.shape_cast %25 : vector<256xf32> to vector<1x256xf32>
    %27 = vector.broadcast %9 : vector<19x1xf32> to vector<19x256xf32>
    %28 = arith.mulf %27, %23 : vector<19x256xf32>
    %cst_11 = arith.constant dense<0.000000e+00> : vector<256xf32>
    %29 = vector.multi_reduction <add>, %28, %cst_11 [0] : vector<19x256xf32> to vector<256xf32>
    %30 = vector.shape_cast %29 : vector<256xf32> to vector<1x256xf32>
    %c255_i32 = arith.constant 255 : i32
    %31 = vector.broadcast %c255_i32 : i32 to vector<1x256xi32>
    %32 = arith.cmpi ne, %8, %31 : vector<1x256xi32>
    %cst_12 = arith.constant 0.000000e+00 : f32
    %33 = vector.broadcast %cst_12 : f32 to vector<1x256xf32>
    %34 = arith.select %32, %30, %33 : vector<1x256xi1>, vector<1x256xf32>
    %c0_13 = arith.constant 0 : index
    %c0_14 = arith.constant 0 : index
    %35 = vector.load %arg5[%c0_13, %c0_14] : memref<1x256xf32, #tpu.memory_space<vmem>>, vector<1x256xf32>
    %36 = arith.subf %18, %26 : vector<1x256xf32>
    %37 = arith.mulf %36, %34 : vector<1x256xf32>
    %38 = arith.addf %35, %37 : vector<1x256xf32>
    %c0_15 = arith.constant 0 : index
    %c0_16 = arith.constant 0 : index
    %39 = vector.load %arg5[%c0_15, %c0_16] : memref<1x256xf32, #tpu.memory_space<vmem>>, vector<1x256xf32>
    tpu.vector_store %arg5[%c0_15, %c0_16], %38 {strides = array<i32>} : memref<1x256xf32, #tpu.memory_space<vmem>>, vector<1x256xf32>,
    %c0_17 = arith.constant 0 : index
    %c0_18 = arith.constant 0 : index
    %40 = vector.load %arg6[%c0_17, %c0_18] : memref<1x256xf32, #tpu.memory_space<vmem>>, vector<1x256xf32>
    %41 = arith.addf %40, %34 : vector<1x256xf32>
    %c0_19 = arith.constant 0 : index
    %c0_20 = arith.constant 0 : index
    %42 = vector.load %arg6[%c0_19, %c0_20] : memref<1x256xf32, #tpu.memory_space<vmem>>, vector<1x256xf32>
    tpu.vector_store %arg6[%c0_19, %c0_20], %41 {strides = array<i32>} : memref<1x256xf32, #tpu.memory_space<vmem>>, vector<1x256xf32>,
    return
  }
  func.func @transform_0(%arg0: i32, %arg1: i32) -> (i32, i32, i32) {
    %c0_i32 = arith.constant 0 : i32
    %c0_i32_0 = arith.constant 0 : i32
    return %arg0, %c0_i32, %arg1 : i32, i32, i32
  }
  func.func @transform_1(%arg0: i32, %arg1: i32) -> (i32, i32, i32) {
    %c0_i32 = arith.constant 0 : i32
    %c0_i32_0 = arith.constant 0 : i32
    return %arg0, %c0_i32, %arg1 : i32, i32, i32
  }
  func.func @transform_2(%arg0: i32, %arg1: i32) -> (i32, i32) {
    %c0_i32 = arith.constant 0 : i32
    %c0_i32_0 = arith.constant 0 : i32
    %c0_i32_1 = arith.constant 0 : i32
    return %c0_i32, %c0_i32_0 : i32, i32
  }
  func.func @transform_3(%arg0: i32, %arg1: i32) -> (i32, i32) {
    %c0_i32 = arith.constant 0 : i32
    %c0_i32_0 = arith.constant 0 : i32
    %c0_i32_1 = arith.constant 0 : i32
    return %c0_i32, %c0_i32_0 : i32, i32
  }
  func.func @transform_4(%arg0: i32, %arg1: i32) -> (i32, i32) {
    %c0_i32 = arith.constant 0 : i32
    %c0_i32_0 = arith.constant 0 : i32
    %c0_i32_1 = arith.constant 0 : i32
    return %c0_i32, %c0_i32_0 : i32, i32
  }
}

</mosaic_0001>

<llo_original>
// kernel: tpu_custom_call.1
$region0: #{tpu_custom_call.1}
  #allocation0 [shape = 'u32[]', space=smem, size = 0x4, offset = 0x4, fixed_abs, tag = 'smem constant byte address 0x4 - core index']
  #allocation1 [shape = 'u32[72,128]{1,0:T(1,128)}', space=vmem, size = 0x9000, scoped, tag = 'internal scratch']
  %s0 = inlined_call_operand.vmem [shape: f32[2,19,256], index: 0, kind: input, shape index: {}]
  %s1 = inlined_call_operand.vmem [shape: s32[2,1,256], index: 1, kind: input, shape index: {}]
  %s2 = inlined_call_operand.vmem [shape: f32[19,1], index: 2, kind: input, shape index: {}]
  %s3 = inlined_call_operand.hbm [shape: f32[1,256], index: 3, kind: output, shape index: {0}]
  %s4 = inlined_call_operand.hbm [shape: f32[1,256], index: 4, kind: output, shape index: {1}]
  %5 = xla_tuple %s3, %s4
  %s6 = sld [smem:[#allocation0]]
  $region57: #{tpu_custom_call.1} parent=0
    _
  %s8 = ssub.s32 1, %s6
  %s9 = scalar_select 0, %s8, %s6
  $region1: #{tpu_custom_call.1} parent=0
    #allocation2 [shape = 'u8[1024]{0}', space=vmem, size = 0x400, scoped, tag = 'output window, operand 0, single buffered']
    #allocation3 [shape = 's32[2]{0}', space=sflag, size = 0x8, scoped, tag = 'scoped memory for tpu_custom_call.1']
    #allocation4 [shape = 'u8[1024]{0}', space=vmem, size = 0x400, scoped, tag = 'output window, operand 1, single buffered']
    #allocation5 [shape = 's32[1]{0}', space=sflag, size = 0x4, scoped, tag = 'scoped memory for tpu_custom_call.1']
    %10 = vsyncpa [#allocation3], 0
    %11 = vsyncpa [#allocation5], 0
    loop: start=0, step=1, limit=4
    $region2: #{tpu_custom_call.1} parent=1 // loop_pre_header
      _
    $region3: #{tpu_custom_call.1} parent=1 // loop_header
      %s13 = sphi 0, %s17
      %p14 = scmp.ge.s32.totalorder %s13, 4
      %s20 = sphi 0, %s32
      %s21 = sphi 0, %s28
      %s22 = sphi 0, %s20
      %s23 = sphi 0, %s21
      %s24 = sphi 0, %s22
      %s25 = sphi 0, %s23
      %s37 = sphi 0, %s39
      %s40 = sphi 0, %s37
      %s41 = sphi 0, %s40
      %s57 = sphi 0, %s41
      %s65 = sphi 0, %s67
      %s68 = sphi 0, %s65
      %s69 = sphi 0, %s68
      %s85 = sphi 0, %s69
      %s89 = sphi 0, %s89
      %s91 = sphi 0, %s89
      %s92 = sphi 0, %s91
      %s106 = sphi 0, %s92
      %s110 = sphi 0, %s110
      %s112 = sphi 0, %s110
      %s113 = sphi 0, %s112
      %s127 = sphi 0, %s113
      %s131 = sphi 0, %s131
      %s133 = sphi 0, %s131
      %s134 = sphi 0, %s133
      %s148 = sphi 0, %s134
    $region4: #{tpu_custom_call.1} parent=1 // loop_header_branch
      %16 = sbr.rel (%p14) target = $region8
    $region5: #{tpu_custom_call.1} parent=1 // loop_body
      %s18 = ssub.s32 %s13, 1
      %s19 = ssub.s32 %s13, 2
      %s26 = sadd.s32 1, %s21
      %p27 = scmp.ge.s32.totalorder %s26, 1
      %s28 = scalar_select %p27, 0, %s26
      %s29 = sadd.s32 1, %s20
      %s30 = scalar_select %p27, %s29, %s20
      %p31 = scmp.ge.s32.totalorder %s30, 2
      %s32 = scalar_select %p31, 0, %s30
      %s33 = ssub.s32 %s20, %s32
      %s34 = ssub.s32 %s21, %s28
      %s35 = sor.u32 %s33, %s34
      %p36 = scmp.eq.s32.totalorder %s35, 0
      %s38 = sadd.s32 %s37, 1
      %s39 = scalar_select %p36, %s37, %s38
      %p42 = pneg %p36
      %p43 = scmp.eq.s32.totalorder %s13, 1
      %p44 = por %p42, %p43
      %p45 = scmp.ne.s32.totalorder %s37, %s40
      %p46 = scmp.eq.s32.totalorder %s13, 0
      %p47 = por %p45, %p46
      %p48 = scmp.ne.s32.totalorder %s37, %s40
      %p49 = scmp.eq.s32.totalorder %s18, 1
      %p50 = por %p48, %p49
      %p51 = scmp.ne.s32.totalorder %s40, %s41
      %p52 = scmp.eq.s32.totalorder %s18, 0
      %p53 = por %p51, %p52
      %p54 = scmp.ne.s32.totalorder %s40, %s41
      %p55 = scmp.eq.s32.totalorder %s19, 1
      %p56 = por %p54, %p55
      %p58 = scmp.ne.s32.totalorder %s41, %s57
      %p59 = scmp.eq.s32.totalorder %s19, 0
      %p60 = por %p58, %p59
      %s61 = ssub.s32 %s20, %s32
      %s62 = ssub.s32 %s21, %s28
      %s63 = sor.u32 %s61, %s62
      %p64 = scmp.eq.s32.totalorder %s63, 0
      %s66 = sadd.s32 %s65, 1
      %s67 = scalar_select %p64, %s65, %s66
      %p70 = pneg %p64
      %p71 = scmp.eq.s32.totalorder %s13, 1
      %p72 = por %p70, %p71
      %p73 = scmp.ne.s32.totalorder %s65, %s68
      %p74 = scmp.eq.s32.totalorder %s13, 0
      %p75 = por %p73, %p74
      %p76 = scmp.ne.s32.totalorder %s65, %s68
      %p77 = scmp.eq.s32.totalorder %s18, 1
      %p78 = por %p76, %p77
      %p79 = scmp.ne.s32.totalorder %s68, %s69
      %p80 = scmp.eq.s32.totalorder %s18, 0
      %p81 = por %p79, %p80
      %p82 = scmp.ne.s32.totalorder %s68, %s69
      %p83 = scmp.eq.s32.totalorder %s19, 1
      %p84 = por %p82, %p83
      %p86 = scmp.ne.s32.totalorder %s69, %s85
      %p87 = scmp.eq.s32.totalorder %s19, 0
      %p88 = por %p86, %p87
      %s90 = sadd.s32 %s89, 1
      %p93 = scmp.eq.s32.totalorder %s13, 1
      %p94 = scmp.ne.s32.totalorder %s89, %s91
      %p95 = scmp.eq.s32.totalorder %s13, 0
      %p96 = por %p94, %p95
      %p97 = scmp.ne.s32.totalorder %s89, %s91
      %p98 = scmp.eq.s32.totalorder %s18, 1
      %p99 = por %p97, %p98
      %p100 = scmp.ne.s32.totalorder %s91, %s92
      %p101 = scmp.eq.s32.totalorder %s18, 0
      %p102 = por %p100, %p101
      %p103 = scmp.ne.s32.totalorder %s91, %s92
      %p104 = scmp.eq.s32.totalorder %s19, 1
      %p105 = por %p103, %p104
      %p107 = scmp.ne.s32.totalorder %s92, %s106
      %p108 = scmp.eq.s32.totalorder %s19, 0
      %p109 = por %p107, %p108
      %s111 = sadd.s32 %s110, 1
      %p114 = scmp.eq.s32.totalorder %s13, 1
      %p115 = scmp.ne.s32.totalorder %s110, %s112
      %p116 = scmp.eq.s32.totalorder %s13, 0
      %p117 = por %p115, %p116
      %p118 = scmp.ne.s32.totalorder %s110, %s112
      %p119 = scmp.eq.s32.totalorder %s18, 1
      %p120 = por %p118, %p119
      %p121 = scmp.ne.s32.totalorder %s112, %s113
      %p122 = scmp.eq.s32.totalorder %s18, 0
      %p123 = por %p121, %p122
      %p124 = scmp.ne.s32.totalorder %s112, %s113
      %p125 = scmp.eq.s32.totalorder %s19, 1
      %p126 = por %p124, %p125
      %p128 = scmp.ne.s32.totalorder %s113, %s127
      %p129 = scmp.eq.s32.totalorder %s19, 0
      %p130 = por %p128, %p129
      %s132 = sadd.s32 %s131, 1
      %p135 = scmp.eq.s32.totalorder %s13, 1
      %p136 = scmp.ne.s32.totalorder %s131, %s133
      %p137 = scmp.eq.s32.totalorder %s13, 0
      %p138 = por %p136, %p137
      %p139 = scmp.ne.s32.totalorder %s131, %s133
      %p140 = scmp.eq.s32.totalorder %s18, 1
      %p141 = por %p139, %p140
      %p142 = scmp.ne.s32.totalorder %s133, %s134
      %p143 = scmp.eq.s32.totalorder %s18, 0
      %p144 = por %p142, %p143
      %p145 = scmp.ne.s32.totalorder %s133, %s134
      %p146 = scmp.eq.s32.totalorder %s19, 1
      %p147 = por %p145, %p146
      %p149 = scmp.ne.s32.totalorder %s134, %s148
      %p150 = scmp.eq.s32.totalorder %s19, 0
      %p151 = por %p149, %p150
      %p152 = scmp.le.s32.totalorder 1, %s13
      %p153 = scmp.lt.s32.totalorder %s13, 3
      %p154 = pnand %p152, %p153
      %p155 = pneg %p154
      // Predicated region
      $region9: #{tpu_custom_call.1} parent=5 // pred_check
        _
      $region10: #{tpu_custom_call.1} parent=5 // pred_check_branch
        %157 = sbr.rel (%p154) target = $region12
      $region11: #{tpu_custom_call.1} parent=5 // pred_region
        %s158 = ssub.s32 %s13, 1
        // Predicated region
        $region13: #{tpu_custom_call.1} parent=11 // pred_check
          %p159 = pneg %p102
        $region14: #{tpu_custom_call.1} parent=11 // pred_check_branch
          %161 = sbr.rel (%p159) target = $region16
        $region15: #{tpu_custom_call.1} parent=11 // pred_region
          _
        $region16: #{tpu_custom_call.1} parent=11 // pred_fallthru
          _
      $region12: #{tpu_custom_call.1} parent=5 // pred_fallthru
        _
      %p162 = scmp.lt.s32.totalorder %s13, 2
      // Predicated region
      $region17: #{tpu_custom_call.1} parent=5 // pred_check
        %p163 = pneg %p162
      $region18: #{tpu_custom_call.1} parent=5 // pred_check_branch
        %165 = sbr.rel (%p163) target = $region20
      $region19: #{tpu_custom_call.1} parent=5 // pred_region
        // Predicated region
        $region21: #{tpu_custom_call.1} parent=19 // pred_check
          %p166 = pneg %p47
        $region22: #{tpu_custom_call.1} parent=19 // pred_check_branch
          %168 = sbr.rel (%p166) target = $region24
        $region23: #{tpu_custom_call.1} parent=19 // pred_region
          %s169 = smul.u32 2, %s21
          %p170 = scmp.lt.s32.totalorder %s20, 1
          %s171 = scalar_select %p170, %s20, 1
          %p172 = scmp.lt.s32.totalorder %s169, 1
          %s173 = scalar_select %p172, %s169, 1
          %s174 = smul.addr %s171, 6
          %s175 = sadd.s32 %s173, %s174
          %s176 = smul.addr %s175, 8
          %s177 = scalar_lea.vmem %s0, %s176
          %s178 = smul.u32 2, %s21
        $region24: #{tpu_custom_call.1} parent=19 // pred_fallthru
          _
        // Predicated region
        $region25: #{tpu_custom_call.1} parent=19 // pred_check
          %p179 = pneg %p75
        $region26: #{tpu_custom_call.1} parent=19 // pred_check_branch
          %181 = sbr.rel (%p179) target = $region28
        $region27: #{tpu_custom_call.1} parent=19 // pred_region
          %s182 = smul.u32 2, %s21
          %p183 = scmp.lt.s32.totalorder %s20, 1
          %s184 = scalar_select %p183, %s20, 1
          %p185 = scmp.lt.s32.totalorder %s182, 1
          %s186 = scalar_select %p185, %s182, 1
          %s187 = smul.addr %s184, 2
          %s188 = sadd.s32 %s186, %s187
          %s189 = scalar_lea.vmem %s1, %s188
          %s190 = smul.u32 2, %s21
        $region28: #{tpu_custom_call.1} parent=19 // pred_fallthru
          _
      $region20: #{tpu_custom_call.1} parent=5 // pred_fallthru
        _
      %p191 = scmp.le.s32.totalorder 1, %s13
      %p192 = scmp.lt.s32.totalorder %s13, 3
      %p193 = pnand %p191, %p192
      %p194 = pneg %p193
      // Predicated region
      $region29: #{tpu_custom_call.1} parent=5 // pred_check
        _
      $region30: #{tpu_custom_call.1} parent=5 // pred_check_branch
        %196 = sbr.rel (%p193) target = $region32
      $region31: #{tpu_custom_call.1} parent=5 // pred_region
        %s197 = ssub.s32 %s13, 1
        %s198 = smul.u32 2, %s23
        %p199 = scmp.lt.s32.totalorder %s22, 1
        %s200 = scalar_select %p199, %s22, 1
        %p201 = scmp.lt.s32.totalorder %s198, 1
        %s202 = scalar_select %p201, %s198, 1
        %s203 = smul.addr %s200, 6
        %s204 = sadd.s32 %s202, %s203
        %s205 = smul.addr %s204, 8
        %s206 = scalar_lea.vmem %s0, %s205
        %p207 = pneg %p53
        %p208 = pneg %p50
        %s209 = smul.u32 2, %s23
        %p210 = scmp.lt.s32.totalorder %s22, 1
        %s211 = scalar_select %p210, %s22, 1
        %p212 = scmp.lt.s32.totalorder %s209, 1
        %s213 = scalar_select %p212, %s209, 1
        %s214 = smul.addr %s211, 2
        %s215 = sadd.s32 %s213, %s214
        %s216 = scalar_lea.vmem %s1, %s215
        %p217 = pneg %p81
        %p218 = pneg %p78
        %p219 = pneg %p102
        %p220 = pneg %p99
        %p221 = pneg %p123
        %p222 = pneg %p120
        %p223 = pneg %p144
        %p224 = pneg %p141
        %s225 = smul.u32 2, %s23
        %p226 = scmp.lt.s32.totalorder %s22, 1
        %s227 = scalar_select %p226, %s22, 1
        %p228 = scmp.lt.s32.totalorder %s225, 1
        %s229 = scalar_select %p228, %s225, 1
        %s230 = smul.addr %s227, 6
        %s231 = sadd.s32 %s229, %s230
        %s232 = smul.addr %s231, 8
        %s233 = scalar_lea.vmem %s0, %s232
        %s234 = smul.u32 2, %s23
        %s235 = smul.u32 2, %s23
        %p236 = scmp.lt.s32.totalorder %s22, 1
        %s237 = scalar_select %p236, %s22, 1
        %p238 = scmp.lt.s32.totalorder %s235, 1
        %s239 = scalar_select %p238, %s235, 1
        %s240 = smul.addr %s237, 2
        %s241 = sadd.s32 %s239, %s240
        %s242 = scalar_lea.vmem %s1, %s241
        %s243 = smul.u32 2, %s23
        %p244 = scmp.eq.s32.totalorder %s22, 0
        %p245 = scmp.eq.s32.totalorder %s23, 0
        %p246 = pnand %p244, %p245
        %p247 = pneg %p246
        // Predicated region
        $region33: #{tpu_custom_call.1} parent=31 // pred_check
          _
        $region34: #{tpu_custom_call.1} parent=31 // pred_check_branch
          %249 = sbr.rel (%p246) target = $region36
        $region35: #{tpu_custom_call.1} parent=31 // pred_region
          %v250 = vlaneseq
          %vm251 = vcmp.ge.s32.totalorder %v250, 0
          %vm252 = vcmp.lt.s32.totalorder %v250, 256
          %vm253 = vmand %vm251, %vm252
          %254 = vst.msk [vmem:[#allocation2] sm:$0x3] %vm253, 0.0
          %255 = vst.msk [vmem:[#allocation4] sm:$0x3] %vm253, 0.0
        $region36: #{tpu_custom_call.1} parent=31 // pred_fallthru
          _
        %v256 = vld [vmem:[%s233] sm:$0xff]
        %v257 = vld [vmem:[%s233 + $0x8] sm:$0xff]
        %v258 = vld [vmem:[%s233 + $0x10] sm:$0xff]
        %v259 = vld [vmem:[%s233 + $0x18] sm:$0xff]
        %v260 = vld [vmem:[%s233 + $0x20] sm:$0x7]
        %v261 = vld [vmem:[%s233 + $0x28] sm:$0x7]
        %v262 = vld [vmem:[%s242] sm:$0x3]
        %v263 = vld [vmem:[%s2] sm:$0xff]
        %v264 = vld [vmem:[%s2 + $0x8] sm:$0xff]
        %v265 = vld [vmem:[%s2 + $0x10] sm:$0x7]
        %vm266 = vcmask 1042432
        %v267 = vsel %vm266, %v260, -inf
        %v268 = vmax.f32 %v256, %v267
        %v269 = vmax.f32 %v268, %v258
        %v270 = vrot.slane %v269, 4
        %v271 = vmax.f32 %v269, %v270
        %v272 = vrot.slane %v271, 2
        %v273 = vmax.f32 %v271, %v272
        %v274 = vrot.slane %v273, 1
        %v275 = vmax.f32 %v273, %v274
        %v276 = vsel %vm266, %v261, -inf
        %v277 = vmax.f32 %v257, %v276
        %v278 = vmax.f32 %v277, %v259
        %v279 = vrot.slane %v278, 4
        %v280 = vmax.f32 %v278, %v279
        %v281 = vrot.slane %v280, 2
        %v282 = vmax.f32 %v280, %v281
        %v283 = vrot.slane %v282, 1
        %v284 = vmax.f32 %v282, %v283
        %v285 = vsub.f32 %v256, %v275
        %v286 = vsub.f32 %v257, %v284
        %v287 = vsub.f32 %v258, %v275
        %v288 = vsub.f32 %v259, %v284
        %v289 = vsub.f32 %v260, %v275
        %v290 = vsub.f32 %v261, %v284
        %v291 = vmul.f32 %v285, 1.442695
        %v292 = vpow.pop %v291
        %v293 = vmul.f32 %v286, 1.442695
        %v294 = vpow.pop %v293
        %v295 = vmul.f32 %v287, 1.442695
        %v296 = vpow.pop %v295
        %v297 = vmul.f32 %v288, 1.442695
        %v298 = vpow.pop %v297
        %v299 = vmul.f32 %v289, 1.442695
        %v300 = vpow.pop %v299
        %v301 = vmul.f32 %v290, 1.442695
        %v302 = vpow.pop %v301
        %v303 = vadd.f32 %v292, %v296
        %v304 = vsel %vm266, %v300, 0.0
        %v305 = vadd.f32 %v303, %v304
        %v306 = vrot.slane %v305, 4
        %v307 = vadd.f32 %v305, %v306
        %v308 = vrot.slane %v307, 2
        %v309 = vadd.f32 %v307, %v308
        %v310 = vrot.slane %v309, 1
        %v311 = vadd.f32 %v309, %v310
        %v312 = vadd.f32 %v294, %v298
        %v313 = vsel %vm266, %v302, 0.0
        %v314 = vadd.f32 %v312, %v313
        %v315 = vrot.slane %v314, 4
        %v316 = vadd.f32 %v314, %v315
        %v317 = vrot.slane %v316, 2
        %v318 = vadd.f32 %v316, %v317
        %v319 = vrot.slane %v318, 1
        %v320 = vadd.f32 %v318, %v319
        %v321 = vlog2.pop %v311
        %v322 = vmul.f32 %v321, 0.6931472
        %v323 = vlog2.pop %v320
        %v324 = vmul.f32 %v323, 0.6931472
        %v325 = vadd.f32 %v322, %v275
        %v326 = vadd.f32 %v324, %v284
        %v327 = vlaneseq
        %v328 = vshrl.u32 %v327, 7
        %v329 = vadd.s32 %v328, 8
        %v330 = vadd.s32 %v328, 16
        %v331 = vperm.slane %v262, 0
        %v332 = vperm.slane %v262, 1
        %vm333 = vcmp.eq.s32.totalorder %v328, %v331
        %vm334 = vcmp.eq.s32.totalorder %v328, %v332
        %vm335 = vcmp.eq.s32.totalorder %v329, %v331
        %vm336 = vcmp.eq.s32.totalorder %v329, %v332
        %vm337 = vcmp.eq.s32.totalorder %v330, %v331
        %vm338 = vcmp.eq.s32.totalorder %v330, %v332
        %v339 = vsel %vm333, 1, 0
        %v340 = vsel %vm334, 1, 0
        %v341 = vsel %vm335, 1, 0
        %v342 = vsel %vm336, 1, 0
        %v343 = vsel %vm337, 1, 0
        %v344 = vsel %vm338, 1, 0
        %v345 = vcvt.s32.f32 %v339
        %v346 = vcvt.s32.f32 %v340
        %v347 = vcvt.s32.f32 %v341
        %v348 = vcvt.s32.f32 %v342
        %v349 = vcvt.s32.f32 %v343
        %v350 = vcvt.s32.f32 %v344
        %v351 = vmul.f32 %v256, %v345
        %v352 = vmul.f32 %v257, %v346
        %v353 = vmul.f32 %v258, %v347
        %v354 = vmul.f32 %v259, %v348
        %v355 = vmul.f32 %v260, %v349
        %v356 = vmul.f32 %v261, %v350
        %v357 = vadd.f32 %v351, %v353
        %v358 = vsel %vm266, %v355, 0.0
        %v359 = vadd.f32 %v357, %v358
        %v360 = vrot.slane %v359, 4
        %v361 = vadd.f32 %v359, %v360
        %v362 = vrot.slane %v361, 2
        %v363 = vadd.f32 %v361, %v362
        %v364 = vrot.slane %v363, 1
        %v365 = vadd.f32 %v363, %v364
        %v366 = vadd.f32 %v352, %v354
        %v367 = vsel %vm266, %v356, 0.0
        %v368 = vadd.f32 %v366, %v367
        %v369 = vrot.slane %v368, 4
        %v370 = vadd.f32 %v368, %v369
        %v371 = vrot.slane %v370, 2
        %v372 = vadd.f32 %v370, %v371
        %v373 = vrot.slane %v372, 1
        %v374 = vadd.f32 %v372, %v373
        %376 = vset.pattern.permute.xlu0 0
        %377 = vperm.xlu0 %376, %v263
        %v378 = vpop.permute.xlu0 %377
        %381 = vset.pattern.permute.xlu0 0
        %382 = vperm.xlu0 %381, %v264
        %v383 = vpop.permute.xlu0 %382
        %386 = vset.pattern.permute.xlu0 0
        %387 = vperm.xlu0 %386, %v265
        %v388 = vpop.permute.xlu0 %387
        %v390 = vmul.f32 %v378, %v345
        %v391 = vmul.f32 %v378, %v346
        %v392 = vmul.f32 %v383, %v347
        %v393 = vmul.f32 %v383, %v348
        %v394 = vmul.f32 %v388, %v349
        %v395 = vmul.f32 %v388, %v350
        %v396 = vadd.f32 %v390, %v392
        %v397 = vsel %vm266, %v394, 0.0
        %v398 = vadd.f32 %v396, %v397
        %v399 = vrot.slane %v398, 4
        %v400 = vadd.f32 %v398, %v399
        %v401 = vrot.slane %v400, 2
        %v402 = vadd.f32 %v400, %v401
        %v403 = vrot.slane %v402, 1
        %v404 = vadd.f32 %v402, %v403
        %v405 = vadd.f32 %v391, %v393
        %v406 = vsel %vm266, %v395, 0.0
        %v407 = vadd.f32 %v405, %v406
        %v408 = vrot.slane %v407, 4
        %v409 = vadd.f32 %v407, %v408
        %v410 = vrot.slane %v409, 2
        %v411 = vadd.f32 %v409, %v410
        %v412 = vrot.slane %v411, 1
        %v413 = vadd.f32 %v411, %v412
        %vm414 = vcmp.ne.s32.totalorder %v262, 255
        %v417 = vrot.slane %v413, 7
        %vm418 = vcmask 1040384
        %v419 = vsel %vm418, %v404, %v417
        %v421 = vsel %vm414, %v419, 0.0
        %v422 = vld [vmem:[#allocation2] sm:$0x3]
        %v423 = vsub.f32 %v325, %v365
        %v424 = vsub.f32 %v326, %v374
        %v426 = vperm.slane %v421, 0
        %v427 = vperm.slane %v421, 1
        %v430 = vmul.f32 %v423, %v426
        %v431 = vmul.f32 %v424, %v427
        %v434 = vrot.slane %v431, 7
        %v435 = vsel %vm418, %v430, %v434
        %v437 = vadd.f32 %v422, %v435
        %v438 = vlaneseq
        %vm439 = vcmp.ge.s32.totalorder %v438, 0
        %vm440 = vcmp.lt.s32.totalorder %v438, 256
        %vm441 = vmand %vm439, %vm440
        %442 = vst.msk [vmem:[#allocation2] sm:$0x3] %vm441, %v437
        %v443 = vld [vmem:[#allocation4] sm:$0x3]
        %v444 = vadd.f32 %v443, %v421
        %445 = vst.msk [vmem:[#allocation4] sm:$0x3] %vm441, %v444
        // Predicated region
        $region37: #{tpu_custom_call.1} parent=31 // pred_check
          %p446 = pneg %p120
        $region38: #{tpu_custom_call.1} parent=31 // pred_check_branch
          %448 = sbr.rel (%p446) target = $region40
        $region39: #{tpu_custom_call.1} parent=31 // pred_region
          %450 = vsyncadd [#allocation3], 0
          %s452 = sshll.u32 [#allocation2], 4
          %s453 = int_to_ptr.vmem [resolvable:$true] %s452
          %s454 = sshll.u32 %s3, 4
          %s455 = int_to_ptr.hbm [resolvable:$true] %s454
          %457 = dma.vmem_to_hbm [thread:$0]  %s453, 32, %s455, [#allocation3]
        $region40: #{tpu_custom_call.1} parent=31 // pred_fallthru
          _
        // Predicated region
        $region41: #{tpu_custom_call.1} parent=31 // pred_check
          %p458 = pneg %p141
        $region42: #{tpu_custom_call.1} parent=31 // pred_check_branch
          %460 = sbr.rel (%p458) target = $region44
        $region43: #{tpu_custom_call.1} parent=31 // pred_region
          %462 = vsyncadd [#allocation5], 0
          %s464 = sshll.u32 [#allocation4], 4
          %s465 = int_to_ptr.vmem [resolvable:$true] %s464
          %s466 = sshll.u32 %s4, 4
          %s467 = int_to_ptr.hbm [resolvable:$true] %s466
          %469 = dma.vmem_to_hbm [thread:$0]  %s465, 32, %s467, [#allocation5]
        $region44: #{tpu_custom_call.1} parent=31 // pred_fallthru
          _
        // Predicated region
        $region45: #{tpu_custom_call.1} parent=31 // pred_check
          %p470 = pneg %p120
        $region46: #{tpu_custom_call.1} parent=31 // pred_check_branch
          %472 = sbr.rel (%p470) target = $region48
        $region47: #{tpu_custom_call.1} parent=31 // pred_region
          %474 = dma.done [#allocation3], 32
        $region48: #{tpu_custom_call.1} parent=31 // pred_fallthru
          _
        // Predicated region
        $region49: #{tpu_custom_call.1} parent=31 // pred_check
          %p475 = pneg %p141
        $region50: #{tpu_custom_call.1} parent=31 // pred_check_branch
          %477 = sbr.rel (%p475) target = $region52
        $region51: #{tpu_custom_call.1} parent=31 // pred_region
          %479 = dma.done [#allocation5], 32
        $region52: #{tpu_custom_call.1} parent=31 // pred_fallthru
          _
      $region32: #{tpu_custom_call.1} parent=5 // pred_fallthru
        _
      %p480 = scmp.le.s32.totalorder 2, %s13
      // Predicated region
      $region53: #{tpu_custom_call.1} parent=5 // pred_check
        %p481 = pneg %p480
      $region54: #{tpu_custom_call.1} parent=5 // pred_check_branch
        %483 = sbr.rel (%p481) target = $region56
      $region55: #{tpu_custom_call.1} parent=5 // pred_region
        %s484 = ssub.s32 %s13, 2
      $region56: #{tpu_custom_call.1} parent=5 // pred_fallthru
        _
    $region6: #{tpu_custom_call.1} parent=1 // loop_footer
      %s17 = sadd.s32 1, %s13
    $region7: #{tpu_custom_call.1} parent=1 // loop_footer_branch
      %12 = sbr.rel target = $region3
    $region8: #{tpu_custom_call.1} parent=1 // loop_exit
      _
    %485 = vsyncpa [#allocation3], 1
    %s486 = scalar_lea.sflag [#allocation3], 1
    %487 = vsyncpa %s486, 1
    %488 = vsyncpa [#allocation5], 1

</llo_original>
